<compile_context>
chip_gen: v7x
topology: tpu7x:2x2x1
jax: 0.10.0
libtpu: 0.0.40
codegen_flags: <defaults>
</compile_context>

<pallas_src>
import functools

import jax
import jax.numpy as jnp
from jax.experimental import pallas as pl
from jax.experimental.pallas import tpu as pltpu

_LANES = 128
_SUBLANES = 8
_TARGET_BLOCK_BYTES = 4 * 1024 * 1024   # per input, per pipeline buffer
_CHUNK_ROWS = 1024                      # inner compute chunk (f32 temps ~0.5 MiB)


def _charbonnier_kernel(x_ref, y_ref, acc_ref, *, eps, block_rows, chunk_rows,
                        blocks_per_core, num_blocks, valid_rows_last):
    """Accumulate sum(sqrt((x-y)^2+eps)) of one (block_rows, 128) tile into acc."""
    step = pl.program_id(1)

    @pl.when(step == 0)
    def _init():
        acc_ref[...] = jnp.zeros_like(acc_ref)

    n_full = block_rows // chunk_rows          # static
    rem = block_rows - n_full * chunk_rows     # static

    def chunk(r0, crows, masked):
        xs = x_ref[pl.ds(r0, crows), :].astype(jnp.float32)
        ys = y_ref[pl.ds(r0, crows), :].astype(jnp.float32)
        d = xs - ys
        err = jnp.sqrt(d * d + eps)            # EUP slot
        if masked:
            # Only generated for (and only executed on) the last, partial block.
            rid = r0 + jax.lax.broadcasted_iota(jnp.int32, (crows, 1), 0)
            err = jnp.where(rid < valid_rows_last, err, 0.0)
        err = err.reshape(crows // _SUBLANES, _SUBLANES, _LANES)
        acc_ref[...] += jnp.sum(err, axis=0)   # VALU adds, no cross-lane work

    def accumulate(masked):
        if n_full > 0:
            def body(c, carry):
                r0 = pl.multiple_of(c * chunk_rows, chunk_rows)
                chunk(r0, chunk_rows, masked)
                return carry
            jax.lax.fori_loop(0, n_full, body, 0)
        if rem > 0:
            chunk(n_full * chunk_rows, rem, masked)

    if valid_rows_last < block_rows:           # static: last block is partial
        g = pl.program_id(0) * blocks_per_core + step

        @pl.when(g == num_blocks - 1)
        def _masked():
            accumulate(True)

        @pl.when(g != num_blocks - 1)
        def _unmasked():
            accumulate(False)
    else:
        accumulate(False)


def charbonnier_loss(x, y, eps=1e-6):
    """L1 Charbonnier loss; matches torch.mean(sqrt((X-Y)^2 + eps))."""
    assert x.shape == y.shape, (x.shape, y.shape)
    n = int(x.size)
    xf = x.reshape(-1)                          # free views (contiguous)
    yf = y.reshape(-1)

    item_max = max(x.dtype.itemsize, y.dtype.itemsize)
    item_min = min(x.dtype.itemsize, y.dtype.itemsize)
    sub = max(_SUBLANES, 32 // item_min)        # sublane packing multiple
    rows = n // _LANES                          # full 128-lane rows

    if rows < sub:                              # tiny input: not worth a kernel
        d = xf.astype(jnp.float32) - yf.astype(jnp.float32)
        return jnp.sum(jnp.sqrt(d * d + eps)) / n

    target_rows = _TARGET_BLOCK_BYTES // (_LANES * item_max)
    target_rows = max(sub, (target_rows // sub) * sub)
    block_rows = min(target_rows, (rows // sub) * sub)
    num_blocks = -(-rows // block_rows)
    valid_rows_last = rows - (num_blocks - 1) * block_rows   # in [1, block_rows]

    # Use both v7x TensorCores when the work splits evenly (harmless on 1-TC chips).
    if num_blocks >= 2 and num_blocks % 2 == 0:
        ncores, bpc = 2, num_blocks // 2
    else:
        ncores, bpc = 1, num_blocks

    n_kernel = rows * _LANES
    if n_kernel == n:
        xk = xf.reshape(rows, _LANES)           # no copy
        yk = yf.reshape(rows, _LANES)
    else:                                       # ragged: slice off the <128-elem tail
        xk = xf[:n_kernel].reshape(rows, _LANES)
        yk = yf[:n_kernel].reshape(rows, _LANES)

    kernel = functools.partial(
        _charbonnier_kernel,
        eps=float(eps),
        block_rows=block_rows,
        chunk_rows=_CHUNK_ROWS,
        blocks_per_core=bpc,
        num_blocks=num_blocks,
        valid_rows_last=valid_rows_last,
    )

    partials = pl.pallas_call(
        kernel,
        out_shape=jax.ShapeDtypeStruct((ncores * _SUBLANES, _LANES), jnp.float32),
        grid_spec=pltpu.PrefetchScalarGridSpec(
            num_scalar_prefetch=0,
            grid=(ncores, bpc),
            in_specs=[
                pl.BlockSpec((block_rows, _LANES), lambda p, i: (p * bpc + i, 0)),
                pl.BlockSpec((block_rows, _LANES), lambda p, i: (p * bpc + i, 0)),
            ],
            # Per-core (8,128) partial-sum block: lane-dense, unmasked stores,
            # resident across the "arbitrary" axis (acts as the accumulator).
            out_specs=pl.BlockSpec((_SUBLANES, _LANES), lambda p, i: (p, 0)),
        ),
        compiler_params=pltpu.CompilerParams(
            dimension_semantics=("parallel", "arbitrary"),
            vmem_limit_bytes=32 * 1024 * 1024,   # safe on v5e (phys 128M) & v7x (phys 64M)
        ),
    )(xk, yk)

    total = jnp.sum(partials)                    # tiny cross-core/lane reduce in XLA
    if n_kernel < n:                             # < 128 leftover elements
        dt = xf[n_kernel:].astype(jnp.float32) - yf[n_kernel:].astype(jnp.float32)
        total = total + jnp.sum(jnp.sqrt(dt * dt + eps))
    return total / n


def charbonnier_ref(x, y, eps=1e-6):
    """Pure-JAX reference for correctness checking."""
    d = x.astype(jnp.float32) - y.astype(jnp.float32)
    return jnp.mean(jnp.sqrt(d * d + eps))


if __name__ == "__main__":
    key = jax.random.PRNGKey(0)
    kx, ky, kx2, ky2 = jax.random.split(key, 4)

    loss_fn = jax.jit(charbonnier_loss)

    # Small image-like pair (batch=2, channels=4, spatial=16x16), f32.
    x = jax.random.normal(kx, (2, 4, 16, 16), jnp.float32)
    y = jax.random.normal(ky, (2, 4, 16, 16), jnp.float32)
    out = jax.block_until_ready(loss_fn(x, y))
    ref = charbonnier_ref(x, y)
    assert out.shape == ()
    assert abs(float(out) - float(ref)) < 1e-5, (float(out), float(ref))

    # Ragged size exercises the partial-block mask + tiny JAX tail path.
    x2 = jax.random.normal(kx2, (3, 5, 7, 11), jnp.float32)
    y2 = jax.random.normal(ky2, (3, 5, 7, 11), jnp.float32)
    out2 = jax.block_until_ready(loss_fn(x2, y2))
    ref2 = charbonnier_ref(x2, y2)
    assert abs(float(out2) - float(ref2)) < 1e-5, (float(out2), float(ref2))

    print("KERNEL_OK")
</pallas_src>

<mosaic_0001>
module attributes {stable_mosaic.version = 11 : i64} {
  func.func @_charbonnier_kernel(%arg0: i32, %arg1: i32, %arg2: memref<16x128xf32, #tpu.memory_space<vmem>>, %arg3: memref<16x128xf32, #tpu.memory_space<vmem>>, %arg4: memref<8x128xf32, #tpu.memory_space<vmem>>) attributes {dimension_semantics = [#tpu.dimension_semantics<parallel>, #tpu.dimension_semantics<arbitrary>], iteration_bounds = array<i64: 1, 1>, scalar_prefetch = 0 : i64, scratch_operands = 0 : i64, tpu.core_type = #tpu.core_type<tc>, window_params = [{transform_indices = @transform_0, window_bounds = array<i64: 16, 128>}, {transform_indices = @transform_1, window_bounds = array<i64: 16, 128>}, {transform_indices = @transform_2, window_bounds = array<i64: 8, 128>}]} {
    %c0_i32 = arith.constant 0 : i32
    %0 = arith.cmpi eq, %arg1, %c0_i32 : i32
    %1 = arith.extui %0 : i1 to i32
    %c0_i32_0 = arith.constant 0 : i32
    %2 = arith.cmpi ne, %1, %c0_i32_0 : i32
    scf.if %2 {
      %cst_9 = arith.constant 0.000000e+00 : f32
      %15 = vector.broadcast %cst_9 : f32 to vector<8x128xf32>
      %c0_10 = arith.constant 0 : index
      %c0_11 = arith.constant 0 : index
      %16 = vector.load %arg4[%c0_10, %c0_11] : memref<8x128xf32, #tpu.memory_space<vmem>>, vector<8x128xf32>
      tpu.vector_store %arg4[%c0_10, %c0_11], %15 {strides = array<i32>} : memref<8x128xf32, #tpu.memory_space<vmem>>, vector<8x128xf32>,
    } else {
    }
    %c0 = arith.constant 0 : index
    %c0_1 = arith.constant 0 : index
    %3 = vector.load %arg2[%c0, %c0_1] : memref<16x128xf32, #tpu.memory_space<vmem>>, vector<16x128xf32>
    %c0_2 = arith.constant 0 : index
    %c0_3 = arith.constant 0 : index
    %4 = vector.load %arg3[%c0_2, %c0_3] : memref<16x128xf32, #tpu.memory_space<vmem>>, vector<16x128xf32>
    %5 = arith.subf %3, %4 : vector<16x128xf32>
    %6 = arith.mulf %5, %5 : vector<16x128xf32>
    %cst = arith.constant 9.99999997E-7 : f32
    %7 = vector.broadcast %cst : f32 to vector<16x128xf32>
    %8 = arith.addf %6, %7 : vector<16x128xf32>
    %9 = math.sqrt %8 : vector<16x128xf32>
    %10 = vector.shape_cast %9 : vector<16x128xf32> to vector<2x8x128xf32>
    %c0_4 = arith.constant 0 : index
    %c0_5 = arith.constant 0 : index
    %11 = vector.load %arg4[%c0_4, %c0_5] : memref<8x128xf32, #tpu.memory_space<vmem>>, vector<8x128xf32>
    %cst_6 = arith.constant dense<0.000000e+00> : vector<8x128xf32>
    %12 = vector.multi_reduction <add>, %10, %cst_6 [0] : vector<2x8x128xf32> to vector<8x128xf32>
    %13 = arith.addf %11, %12 : vector<8x128xf32>
    %c0_7 = arith.constant 0 : index
    %c0_8 = arith.constant 0 : index
    %14 = vector.load %arg4[%c0_7, %c0_8] : memref<8x128xf32, #tpu.memory_space<vmem>>, vector<8x128xf32>
    tpu.vector_store %arg4[%c0_7, %c0_8], %13 {strides = array<i32>} : memref<8x128xf32, #tpu.memory_space<vmem>>, vector<8x128xf32>,
    return
  }
  func.func @transform_0(%arg0: i32, %arg1: i32) -> (i32, i32) {
    %c1_i32 = arith.constant 1 : i32
    %0 = arith.muli %arg0, %c1_i32 : i32
    %1 = arith.addi %0, %arg1 : i32
    %c0_i32 = arith.constant 0 : i32
    %c0_i32_0 = arith.constant 0 : i32
    return %1, %c0_i32 : i32, i32
  }
  func.func @transform_1(%arg0: i32, %arg1: i32) -> (i32, i32) {
    %c1_i32 = arith.constant 1 : i32
    %0 = arith.muli %arg0, %c1_i32 : i32
    %1 = arith.addi %0, %arg1 : i32
    %c0_i32 = arith.constant 0 : i32
    %c0_i32_0 = arith.constant 0 : i32
    return %1, %c0_i32 : i32, i32
  }
  func.func @transform_2(%arg0: i32, %arg1: i32) -> (i32, i32) {
    %c0_i32 = arith.constant 0 : i32
    %c0_i32_0 = arith.constant 0 : i32
    return %arg0, %c0_i32 : i32, i32
  }
}

</mosaic_0001>

<llo_original>
// kernel: charbonnier_loss.1
$region0: #{charbonnier_loss.1}
  #allocation0 [shape = 'u32[]', space=smem, size = 0x4, offset = 0x4, fixed_abs, tag = 'smem constant byte address 0x4 - core index']
  #allocation1 [shape = 'u32[144,128]{1,0:T(1,128)}', space=vmem, size = 0x12000, scoped, tag = 'internal scratch']
  %s0 = inlined_call_operand.vmem [shape: f32[16,128], index: 0, kind: input, shape index: {}]
  %s1 = inlined_call_operand.vmem [shape: f32[16,128], index: 1, kind: input, shape index: {}]
  %s2 = inlined_call_operand.vmem [shape: f32[8,128], index: 2, kind: output, shape index: {}]
  %s3 = sld [smem:[#allocation0]]
  $region22: #{charbonnier_loss.1} parent=0
    _
  %s5 = ssub.s32 1, %s3
  %s6 = scalar_select 0, %s5, %s3
  // Predicated region
  $region2: #{charbonnier_loss.1} parent=0 // pred_check
    _
  $region3: #{charbonnier_loss.1} parent=0 // pred_check_branch
    %8 = sbr.rel (0) target = $region5
  $region4: #{charbonnier_loss.1} parent=0 // pred_region
    %s9 = sadd.s32 0, 0
    %s10 = smul.u32 2, %s9
    %p11 = scmp.lt.s32.totalorder %s10, 1
    %s12 = scalar_select %p11, %s10, 1
    %s13 = smul.addr %s12, 8
    %s14 = scalar_lea.vmem %s0, %s13
    %s15 = sadd.s32 0, 0
    %s16 = smul.u32 2, %s15
  $region5: #{charbonnier_loss.1} parent=0 // pred_fallthru
    _
  // Predicated region
  $region6: #{charbonnier_loss.1} parent=0 // pred_check
    _
  $region7: #{charbonnier_loss.1} parent=0 // pred_check_branch
    %18 = sbr.rel (0) target = $region9
  $region8: #{charbonnier_loss.1} parent=0 // pred_region
    %s19 = sadd.s32 0, 0
    %s20 = smul.u32 2, %s19
    %p21 = scmp.lt.s32.totalorder %s20, 1
    %s22 = scalar_select %p21, %s20, 1
    %s23 = smul.addr %s22, 8
    %s24 = scalar_lea.vmem %s1, %s23
    %s25 = sadd.s32 0, 0
    %s26 = smul.u32 2, %s25
  $region9: #{charbonnier_loss.1} parent=0 // pred_fallthru
    _
  %s27 = sadd.s32 0, 0
  %s28 = smul.u32 2, %s27
  %p29 = scmp.lt.s32.totalorder %s28, 1
  %s30 = scalar_select %p29, %s28, 1
  %s31 = smul.addr %s30, 8
  %s32 = scalar_lea.vmem %s0, %s31
  %s33 = sadd.s32 0, 0
  %s34 = smul.u32 2, %s33
  %p35 = scmp.lt.s32.totalorder %s34, 1
  %s36 = scalar_select %p35, %s34, 1
  %s37 = smul.addr %s36, 8
  %s38 = scalar_lea.vmem %s1, %s37
  %s39 = sadd.s32 0, 0
  %s40 = smul.u32 2, %s39
  %p41 = scmp.lt.s32.totalorder %s40, 1
  %s42 = scalar_select %p41, %s40, 1
  %s43 = smul.addr %s42, 8
  %s44 = scalar_lea.vmem %s0, %s43
  %s45 = sadd.s32 0, 0
  %s46 = smul.u32 2, %s45
  %s47 = sadd.s32 0, 0
  %s48 = smul.u32 2, %s47
  %p49 = scmp.lt.s32.totalorder %s48, 1
  %s50 = scalar_select %p49, %s48, 1
  %s51 = smul.addr %s50, 8
  %s52 = scalar_lea.vmem %s1, %s51
  %s53 = sadd.s32 0, 0
  %s54 = smul.u32 2, %s53
  %p55 = scmp.eq.s32.totalorder 0, 0
  // Predicated region
  $region10: #{charbonnier_loss.1} parent=0 // pred_check
    %p56 = pneg %p55
  $region11: #{charbonnier_loss.1} parent=0 // pred_check_branch
    %58 = sbr.rel (%p56) target = $region13
  $region12: #{charbonnier_loss.1} parent=0 // pred_region
    %59 = vst [vmem:[%s2] sm:$0xff] 0.0
  $region13: #{charbonnier_loss.1} parent=0 // pred_fallthru
    _
  %v60 = vld [vmem:[%s44] sm:$0xff]
  %v61 = vld [vmem:[%s44 + $0x8] sm:$0xff]
  %v62 = vld [vmem:[%s52] sm:$0xff]
  %v63 = vld [vmem:[%s52 + $0x8] sm:$0xff]
  %v64 = vsub.f32 %v60, %v62
  %v65 = vsub.f32 %v61, %v63
  %v66 = vmul.f32 %v64, %v64
  %v67 = vmul.f32 %v65, %v65
  %v68 = vadd.f32 %v66, 1e-06
  %v69 = vadd.f32 %v67, 1e-06
  %v70 = vrsqrt.pop %v68
  %v71 = vmul.f32 %v68, %v70
  %vm72 = vcmp.eq.f32.partialorder %v68, inf
  %v73 = vsel %vm72, %v68, %v71
  %vm74 = vcmp.eq.f32.partialorder %v68, 0.0
  %v75 = vand.u32 %v68, 2147483648
  %v76 = vsel %vm74, %v75, %v73
  %v77 = vrsqrt.pop %v69
  %v78 = vmul.f32 %v69, %v77
  %vm79 = vcmp.eq.f32.partialorder %v69, inf
  %v80 = vsel %vm79, %v69, %v78
  %vm81 = vcmp.eq.f32.partialorder %v69, 0.0
  %v82 = vand.u32 %v69, 2147483648
  %v83 = vsel %vm81, %v82, %v80
  %v84 = vld [vmem:[%s2] sm:$0xff]
  %v85 = vadd.f32 %v76, %v83
  %v86 = vadd.f32 %v84, %v85
  %87 = vst [vmem:[%s2] sm:$0xff] %v86
  // Predicated region
  $region14: #{charbonnier_loss.1} parent=0 // pred_check
    _
  $region15: #{charbonnier_loss.1} parent=0 // pred_check_branch
    %89 = sbr.rel (0) target = $region17
  $region16: #{charbonnier_loss.1} parent=0 // pred_region
    _
  $region17: #{charbonnier_loss.1} parent=0 // pred_fallthru
    _
  // Predicated region
  $region18: #{charbonnier_loss.1} parent=0 // pred_check
    _
  $region19: #{charbonnier_loss.1} parent=0 // pred_check_branch
    %91 = sbr.rel (0) target = $region21
  $region20: #{charbonnier_loss.1} parent=0 // pred_region
    _
  $region21: #{charbonnier_loss.1} parent=0 // pred_fallthru
    _

</llo_original>
